<compile_context>
chip_gen: v7x
topology: tpu7x:2x2x1
jax: 0.10.0
libtpu: 0.0.40
codegen_flags: <defaults>
</compile_context>

<pallas_src>
import jax
import jax.numpy as jnp
from jax.experimental import pallas as pl
from jax.experimental.pallas import tpu as pltpu

MEAN = [0.485, 0.456, 0.406]
STD = [0.229, 0.224, 0.225]


def _normalize_kernel(scale_ref, bias_ref, x_ref, o_ref):
    # scale_ref / bias_ref: SMEM (C,) float32 per-channel affine constants.
    # x_ref / o_ref:        VMEM (block_n, 1, block_r, lane_w) slabs of one channel.
    c = pl.program_id(1)
    s = scale_ref[c]
    b = bias_ref[c]
    o_ref[...] = (x_ref[...].astype(jnp.float32) * s + b).astype(o_ref.dtype)


def normalize(x, mean, std, *, target_block_bytes=2 * 1024 * 1024):
    """x: (N, C, H, W); mean/std: length-C sequences. Returns (x - mean) / std per channel."""
    n, c, h, w = x.shape
    L = h * w
    itemsize = jnp.dtype(x.dtype).itemsize

    # Per-channel affine constants, computed at float32 precision.
    std32 = jnp.asarray(std, dtype=jnp.float32)
    mean32 = jnp.asarray(mean, dtype=jnp.float32)
    scale = 1.0 / std32          # (C,)
    bias = -mean32 / std32       # (C,)

    # Dense rows x 128-lane view of each (n, c) spatial slab.
    if L % 128 == 0:
        lane_w = 128
        R = L // 128
    else:
        # Fallback: full spatial extent in the lane dim (legal: equals full dim).
        lane_w = L
        R = 1
    x4 = x.reshape(n, c, R, lane_w)

    # Rows per block: multiple of 8, or the full row extent.
    rows_budget = max(1, target_block_bytes // (lane_w * itemsize))
    if R <= 8 or R <= rows_budget:
        block_r = R
    else:
        block_r = min(R, max(8, (rows_budget // 8) * 8))

    # Images per block: fill the remaining byte budget (helps small C*H*W).
    per_n_bytes = block_r * lane_w * itemsize
    block_n = int(min(n, max(1, target_block_bytes // per_n_bytes)))

    grid = (pl.cdiv(n, block_n), c, pl.cdiv(R, block_r))
    # Keep >= 2 grid steps when possible (pipelining overlap / v7x's 2 TensorCores).
    if grid[0] * grid[1] * grid[2] < 2 and block_n > 1:
        block_n = (block_n + 1) // 2
        grid = (pl.cdiv(n, block_n), c, pl.cdiv(R, block_r))

    block = (block_n, 1, block_r, lane_w)
    data_spec = pl.BlockSpec(block, lambda nb, ci, rb, *_: (nb, ci, rb, 0))

    out4 = pl.pallas_call(
        _normalize_kernel,
        out_shape=jax.ShapeDtypeStruct((n, c, R, lane_w), x.dtype),
        grid_spec=pltpu.PrefetchScalarGridSpec(
            num_scalar_prefetch=2,       # scale, bias -> SMEM
            grid=grid,
            in_specs=[data_spec],
            out_specs=data_spec,
        ),
        compiler_params=pltpu.CompilerParams(
            dimension_semantics=("parallel", "parallel", "parallel"),
            vmem_limit_bytes=48 * 1024 * 1024,
        ),
    )(scale, bias, x4)

    return out4.reshape(n, c, h, w)


if __name__ == "__main__":
    key = jax.random.PRNGKey(0)
    # Small NCHW input consistent with the module: 3 channels (mean/std have len 3).
    x = jax.random.uniform(key, (2, 3, 16, 16), dtype=jnp.float32)

    out = normalize(x, MEAN, STD)
    out = jax.block_until_ready(out)

    # Reference check (plain JAX, mirrors the PyTorch loop semantics).
    mean_ref = jnp.asarray(MEAN, dtype=jnp.float32).reshape(1, 3, 1, 1)
    std_ref = jnp.asarray(STD, dtype=jnp.float32).reshape(1, 3, 1, 1)
    expected = (x - mean_ref) / std_ref
    assert out.shape == x.shape and out.dtype == x.dtype
    assert jnp.allclose(out, expected, atol=1e-5, rtol=1e-5)

    print("KERNEL_OK")
</pallas_src>

<mosaic_0001>
module attributes {stable_mosaic.version = 11 : i64} {
  func.func @_normalize_kernel(%arg0: i32, %arg1: i32, %arg2: i32, %arg3: memref<3xf32, #tpu.memory_space<smem>>, %arg4: memref<3xf32, #tpu.memory_space<smem>>, %arg5: memref<2x1x2x128xf32, #tpu.memory_space<vmem>>, %arg6: memref<2x1x2x128xf32, #tpu.memory_space<vmem>>) attributes {dimension_semantics = [#tpu.dimension_semantics<parallel>, #tpu.dimension_semantics<parallel>, #tpu.dimension_semantics<parallel>], iteration_bounds = array<i64: 1, 3, 1>, scalar_prefetch = 2 : i64, scratch_operands = 0 : i64, tpu.core_type = #tpu.core_type<tc>, window_params = [{transform_indices = @transform_0, window_bounds = array<i64: 2, 1, 2, 128>}, {transform_indices = @transform_1, window_bounds = array<i64: 2, 1, 2, 128>}]} {
    %0 = arith.index_cast %arg1 : i32 to index
    %1 = memref.load %arg3[%0] : memref<3xf32, #tpu.memory_space<smem>>
    %2 = arith.index_cast %arg1 : i32 to index
    %3 = memref.load %arg4[%2] : memref<3xf32, #tpu.memory_space<smem>>
    %c0 = arith.constant 0 : index
    %c0_0 = arith.constant 0 : index
    %c0_1 = arith.constant 0 : index
    %c0_2 = arith.constant 0 : index
    %4 = vector.load %arg5[%c0, %c0_0, %c0_1, %c0_2] : memref<2x1x2x128xf32, #tpu.memory_space<vmem>>, vector<2x1x2x128xf32>
    %5 = vector.broadcast %1 : f32 to vector<2x1x2x128xf32>
    %6 = arith.mulf %4, %5 : vector<2x1x2x128xf32>
    %7 = vector.broadcast %3 : f32 to vector<2x1x2x128xf32>
    %8 = arith.addf %6, %7 : vector<2x1x2x128xf32>
    %c0_3 = arith.constant 0 : index
    %c0_4 = arith.constant 0 : index
    %c0_5 = arith.constant 0 : index
    %c0_6 = arith.constant 0 : index
    %9 = vector.load %arg6[%c0_3, %c0_4, %c0_5, %c0_6] : memref<2x1x2x128xf32, #tpu.memory_space<vmem>>, vector<2x1x2x128xf32>
    tpu.vector_store %arg6[%c0_3, %c0_4, %c0_5, %c0_6], %8 {strides = array<i32>} : memref<2x1x2x128xf32, #tpu.memory_space<vmem>>, vector<2x1x2x128xf32>,
    return
  }
  func.func @transform_0(%arg0: i32, %arg1: i32, %arg2: i32, %arg3: memref<3xf32, #tpu.memory_space<smem>>, %arg4: memref<3xf32, #tpu.memory_space<smem>>) -> (i32, i32, i32, i32) {
    %c0_i32 = arith.constant 0 : i32
    %c0_i32_0 = arith.constant 0 : i32
    return %arg0, %arg1, %arg2, %c0_i32 : i32, i32, i32, i32
  }
  func.func @transform_1(%arg0: i32, %arg1: i32, %arg2: i32, %arg3: memref<3xf32, #tpu.memory_space<smem>>, %arg4: memref<3xf32, #tpu.memory_space<smem>>) -> (i32, i32, i32, i32) {
    %c0_i32 = arith.constant 0 : i32
    %c0_i32_0 = arith.constant 0 : i32
    return %arg0, %arg1, %arg2, %c0_i32 : i32, i32, i32, i32
  }
}

</mosaic_0001>

<llo_original>
// kernel: tpu_custom_call.1
$region0: #{tpu_custom_call.1}
  #allocation0 [shape = 'u32[]', space=smem, size = 0x4, offset = 0x4, fixed_abs, tag = 'smem constant byte address 0x4 - core index']
  #allocation1 [shape = 'u32[144,128]{1,0:T(1,128)}', space=vmem, size = 0x12000, scoped, tag = 'internal scratch']
  #allocation2 [shape = 's32[1]{0}', space=sflag, size = 0x4, scoped, tag = 'scoped memory for tpu_custom_call.1']
  #allocation3 [shape = 'u8[512]{0}', space=smem, size = 0x200, scoped, tag = 'prefetched SMEM operand 0']
  #allocation4 [shape = 'u8[512]{0}', space=smem, size = 0x200, scoped, tag = 'prefetched SMEM operand 1']
  %s0 = inlined_call_operand.hbm [shape: f32[3], index: 0, kind: input, shape index: {}]
  %s1 = inlined_call_operand.vmem [shape: f32[3], index: 1, kind: input, shape index: {}]
  %s2 = inlined_call_operand.hbm [shape: f32[2,3,2,128], index: 2, kind: input, shape index: {}]
  %s3 = inlined_call_operand.hbm [shape: f32[2,3,2,128], index: 3, kind: output, shape index: {}]
  %s4 = sld [smem:[#allocation0]]
  $region41: #{tpu_custom_call.1} parent=0
    _
  %s6 = ssub.s32 1, %s4
  %s7 = scalar_select 0, %s6, %s4
  %9 = dma.hbm_to_smem %s0, 16, [#allocation3], [#allocation2]
  %s10 = sshll.u32 %s1, 4
  %s11 = int_to_ptr.vmem [resolvable:$true] %s10
  %13 = dma.vmem_to_smem %s11, 16, [#allocation4], [#allocation2]
  %14 = dma.done [#allocation2], 32
  %15 = sfence
  $region1: #{tpu_custom_call.1} parent=0
    #allocation5 [shape = 'u8[4096]{0}', space=vmem, size = 0x1000, scoped, tag = 'input window, operand 2']
    #allocation6 [shape = 's32[2]{0}', space=sflag, size = 0x8, scoped, tag = 'scoped memory for tpu_custom_call.1']
    #allocation7 [shape = 's32[2]{0}', space=sflag, size = 0x8, scoped, tag = 'scoped memory for tpu_custom_call.1']
    #allocation8 [shape = 'u8[4096]{0}', space=vmem, size = 0x1000, scoped, tag = 'output window, operand 0']
    %16 = vsyncpa [#allocation6], 0
    %s17 = scalar_lea.sflag [#allocation6], 1
    %18 = vsyncpa %s17, 0
    %19 = vsyncpa [#allocation7], 0
    %s20 = scalar_lea.sflag [#allocation7], 1
    %21 = vsyncpa %s20, 0
    loop: start=0, step=1, limit=5
    $region2: #{tpu_custom_call.1} parent=1 // loop_pre_header
      _
    $region3: #{tpu_custom_call.1} parent=1 // loop_header
      %s23 = sphi 0, %s27
      %p24 = scmp.ge.s32.totalorder %s23, 5
      %s30 = sphi 0, %s49
      %s31 = sphi 0, %s45
      %s32 = sphi 0, %s41
      %s33 = sphi 0, %s30
      %s34 = sphi 0, %s31
      %s35 = sphi 0, %s32
      %s36 = sphi 0, %s33
      %s37 = sphi 0, %s34
      %s38 = sphi 0, %s35
      %s56 = sphi 0, %s58
      %s59 = sphi 0, %s56
      %s60 = sphi 0, %s59
      %s76 = sphi 0, %s60
      %s86 = sphi 0, %s88
      %s89 = sphi 0, %s86
      %s90 = sphi 0, %s89
      %s106 = sphi 0, %s90
    $region4: #{tpu_custom_call.1} parent=1 // loop_header_branch
      %26 = sbr.rel (%p24) target = $region8
    $region5: #{tpu_custom_call.1} parent=1 // loop_body
      %s28 = ssub.s32 %s23, 1
      %s29 = ssub.s32 %s23, 2
      %s39 = sadd.s32 1, %s32
      %p40 = scmp.ge.s32.totalorder %s39, 1
      %s41 = scalar_select %p40, 0, %s39
      %s42 = sadd.s32 1, %s31
      %s43 = scalar_select %p40, %s42, %s31
      %p44 = scmp.ge.s32.totalorder %s43, 3
      %s45 = scalar_select %p44, 0, %s43
      %s46 = sadd.s32 1, %s30
      %s47 = scalar_select %p44, %s46, %s30
      %p48 = scmp.ge.s32.totalorder %s47, 1
      %s49 = scalar_select %p48, 0, %s47
      %s50 = ssub.s32 %s30, %s49
      %s51 = ssub.s32 %s31, %s45
      %s52 = sor.u32 %s50, %s51
      %s53 = ssub.s32 %s32, %s41
      %s54 = sor.u32 %s52, %s53
      %p55 = scmp.eq.s32.totalorder %s54, 0
      %s57 = sadd.s32 %s56, 1
      %s58 = scalar_select %p55, %s56, %s57
      %p61 = pneg %p55
      %p62 = scmp.eq.s32.totalorder %s23, 2
      %p63 = por %p61, %p62
      %p64 = scmp.ne.s32.totalorder %s56, %s59
      %p65 = scmp.eq.s32.totalorder %s23, 0
      %p66 = por %p64, %p65
      %p67 = scmp.ne.s32.totalorder %s56, %s59
      %p68 = scmp.eq.s32.totalorder %s28, 2
      %p69 = por %p67, %p68
      %p70 = scmp.ne.s32.totalorder %s59, %s60
      %p71 = scmp.eq.s32.totalorder %s28, 0
      %p72 = por %p70, %p71
      %p73 = scmp.ne.s32.totalorder %s59, %s60
      %p74 = scmp.eq.s32.totalorder %s29, 2
      %p75 = por %p73, %p74
      %p77 = scmp.ne.s32.totalorder %s60, %s76
      %p78 = scmp.eq.s32.totalorder %s29, 0
      %p79 = por %p77, %p78
      %s80 = ssub.s32 %s30, %s49
      %s81 = ssub.s32 %s31, %s45
      %s82 = sor.u32 %s80, %s81
      %s83 = ssub.s32 %s32, %s41
      %s84 = sor.u32 %s82, %s83
      %p85 = scmp.eq.s32.totalorder %s84, 0
      %s87 = sadd.s32 %s86, 1
      %s88 = scalar_select %p85, %s86, %s87
      %p91 = pneg %p85
      %p92 = scmp.eq.s32.totalorder %s23, 2
      %p93 = por %p91, %p92
      %p94 = scmp.ne.s32.totalorder %s86, %s89
      %p95 = scmp.eq.s32.totalorder %s23, 0
      %p96 = por %p94, %p95
      %p97 = scmp.ne.s32.totalorder %s86, %s89
      %p98 = scmp.eq.s32.totalorder %s28, 2
      %p99 = por %p97, %p98
      %p100 = scmp.ne.s32.totalorder %s89, %s90
      %p101 = scmp.eq.s32.totalorder %s28, 0
      %p102 = por %p100, %p101
      %p103 = scmp.ne.s32.totalorder %s89, %s90
      %p104 = scmp.eq.s32.totalorder %s29, 2
      %p105 = por %p103, %p104
      %p107 = scmp.ne.s32.totalorder %s90, %s106
      %p108 = scmp.eq.s32.totalorder %s29, 0
      %p109 = por %p107, %p108
      %p110 = scmp.le.s32.totalorder 1, %s23
      %p111 = scmp.lt.s32.totalorder %s23, 4
      %p112 = pnand %p110, %p111
      %p113 = pneg %p112
      // Predicated region
      $region9: #{tpu_custom_call.1} parent=5 // pred_check
        _
      $region10: #{tpu_custom_call.1} parent=5 // pred_check_branch
        %115 = sbr.rel (%p112) target = $region12
      $region11: #{tpu_custom_call.1} parent=5 // pred_region
        %s116 = ssub.s32 %s23, 1
      $region12: #{tpu_custom_call.1} parent=5 // pred_fallthru
        _
      %p117 = scmp.lt.s32.totalorder %s23, 3
      // Predicated region
      $region13: #{tpu_custom_call.1} parent=5 // pred_check
        %p118 = pneg %p117
      $region14: #{tpu_custom_call.1} parent=5 // pred_check_branch
        %120 = sbr.rel (%p118) target = $region16
      $region15: #{tpu_custom_call.1} parent=5 // pred_region
        // Predicated region
        $region17: #{tpu_custom_call.1} parent=15 // pred_check
          %p121 = pneg %p66
        $region18: #{tpu_custom_call.1} parent=15 // pred_check_branch
          %123 = sbr.rel (%p121) target = $region20
        $region19: #{tpu_custom_call.1} parent=15 // pred_region
          %s124 = sand.u32 %s56, 1
          %s125 = scalar_lea.sflag [#allocation6], %s124
          %s126 = sand.u32 %s56, 1
          %s127 = smul.addr %s126, 4
          %s128 = scalar_lea.vmem [#allocation5], %s127
          %s129 = smul.u32 2, %s30
          %s131 = ssub.s32 64, 64
          %132 = vsyncadd %s125, %s131
          %s133 = sadd.s32 %s32, %s31
          %s134 = smul.addr %s129, 3
          %s135 = sadd.s32 %s133, %s134
          %s136 = smul.addr %s135, 32
          %s137 = scalar_lea.hbm %s2, %s136
          %s138 = sshll.u32 %s128, 4
          %s139 = int_to_ptr.vmem [resolvable:$true] %s138
          %144 = dma.hbm_to_vmem [thread:$0]  %s137, 64, %s139, %s125, 96, 32, 2
        $region20: #{tpu_custom_call.1} parent=15 // pred_fallthru
          _
      $region16: #{tpu_custom_call.1} parent=5 // pred_fallthru
        _
      %p145 = scmp.le.s32.totalorder 1, %s23
      %p146 = scmp.lt.s32.totalorder %s23, 4
      %p147 = pnand %p145, %p146
      %p148 = pneg %p147
      // Predicated region
      $region21: #{tpu_custom_call.1} parent=5 // pred_check
        _
      $region22: #{tpu_custom_call.1} parent=5 // pred_check_branch
        %150 = sbr.rel (%p147) target = $region24
      $region23: #{tpu_custom_call.1} parent=5 // pred_region
        %s151 = ssub.s32 %s23, 1
        %s152 = sand.u32 %s59, 1
        %s153 = scalar_lea.sflag [#allocation6], %s152
        %s154 = sand.u32 %s59, 1
        %s155 = smul.addr %s154, 4
        %s156 = scalar_lea.vmem [#allocation5], %s155
        // Predicated region
        $region25: #{tpu_custom_call.1} parent=23 // pred_check
          %p157 = pneg %p72
        $region26: #{tpu_custom_call.1} parent=23 // pred_check_branch
          %159 = sbr.rel (%p157) target = $region28
        $region27: #{tpu_custom_call.1} parent=23 // pred_region
          %160 = dma.done %s153, 64
        $region28: #{tpu_custom_call.1} parent=23 // pred_fallthru
          _
        %s161 = sand.u32 %s59, 1
        %s162 = scalar_lea.sflag [#allocation6], %s161
        %s163 = sand.u32 %s59, 1
        %s164 = smul.addr %s163, 4
        %s165 = scalar_lea.vmem [#allocation5], %s164
        %p166 = pneg %p72
        %p167 = pneg %p69
        %p168 = pneg %p102
        %p169 = pneg %p99
        %s170 = sand.u32 %s89, 1
        %s171 = scalar_lea.sflag [#allocation7], %s170
        %s172 = sand.u32 %s89, 1
        %s173 = smul.addr %s172, 4
        %s174 = scalar_lea.vmem [#allocation8], %s173
        %s175 = smul.u32 2, %s33
        %s176 = smul.u32 2, %s33
        %s177 = sld [smem:[#allocation3 + %s34]]
        %s178 = sld [smem:[#allocation4 + %s34]]
        %v179 = vld [vmem:[%s156] sm:$0x3]
        %v180 = vld [vmem:[%s156 + $0x2] sm:$0x3]
        %v181 = vstv %s177
        %v182 = vmul.f32 %v179, %v181
        %v183 = vmul.f32 %v180, %v181
        %v184 = vstv %s178
        %v185 = vadd.f32 %v182, %v184
        %v186 = vadd.f32 %v183, %v184
        %187 = vst [vmem:[%s174] sm:$0x3] %v185
        %188 = vst [vmem:[%s174 + $0x2] sm:$0x3] %v186
        %s189 = sand.u32 %s89, 1
        %s190 = scalar_lea.sflag [#allocation7], %s189
        %s191 = sand.u32 %s89, 1
        %s192 = smul.addr %s191, 4
        %s193 = scalar_lea.vmem [#allocation8], %s192
        // Predicated region
        $region29: #{tpu_custom_call.1} parent=23 // pred_check
          %p194 = pneg %p99
        $region30: #{tpu_custom_call.1} parent=23 // pred_check_branch
          %196 = sbr.rel (%p194) target = $region32
        $region31: #{tpu_custom_call.1} parent=23 // pred_region
          %s197 = smul.u32 2, %s33
          %s199 = ssub.s32 64, 64
          %200 = vsyncadd %s190, %s199
          %s201 = sadd.s32 %s35, %s34
          %s202 = smul.addr %s197, 3
          %s203 = sadd.s32 %s201, %s202
          %s204 = smul.addr %s203, 32
          %s205 = scalar_lea.hbm %s3, %s204
          %s206 = sshll.u32 %s193, 4
          %s207 = int_to_ptr.vmem [resolvable:$true] %s206
          %212 = dma.vmem_to_hbm [thread:$0]  %s207, 64, %s205, %s190, 32, 96, 2
        $region32: #{tpu_custom_call.1} parent=23 // pred_fallthru
          _
      $region24: #{tpu_custom_call.1} parent=5 // pred_fallthru
        _
      %p213 = scmp.le.s32.totalorder 2, %s23
      // Predicated region
      $region33: #{tpu_custom_call.1} parent=5 // pred_check
        %p214 = pneg %p213
      $region34: #{tpu_custom_call.1} parent=5 // pred_check_branch
        %216 = sbr.rel (%p214) target = $region36
      $region35: #{tpu_custom_call.1} parent=5 // pred_region
        %s217 = ssub.s32 %s23, 2
        // Predicated region
        $region37: #{tpu_custom_call.1} parent=35 // pred_check
          %p218 = pneg %p105
        $region38: #{tpu_custom_call.1} parent=35 // pred_check_branch
          %220 = sbr.rel (%p218) target = $region40
        $region39: #{tpu_custom_call.1} parent=35 // pred_region
          %s221 = sand.u32 %s90, 1
          %s222 = scalar_lea.sflag [#allocation7], %s221
          %s223 = sand.u32 %s90, 1
          %s224 = smul.addr %s223, 4
          %s225 = scalar_lea.vmem [#allocation8], %s224
          %226 = dma.done %s222, 64
        $region40: #{tpu_custom_call.1} parent=35 // pred_fallthru
          _
      $region36: #{tpu_custom_call.1} parent=5 // pred_fallthru
        _
    $region6: #{tpu_custom_call.1} parent=1 // loop_footer
      %s27 = sadd.s32 1, %s23
    $region7: #{tpu_custom_call.1} parent=1 // loop_footer_branch
      %22 = sbr.rel target = $region3
    $region8: #{tpu_custom_call.1} parent=1 // loop_exit
      _
    %227 = vsyncpa [#allocation6], 1
    %s228 = scalar_lea.sflag [#allocation6], 1
    %229 = vsyncpa %s228, 1
    %230 = vsyncpa [#allocation7], 1
    %s231 = scalar_lea.sflag [#allocation7], 1
    %232 = vsyncpa %s231, 1

</llo_original>
